<compile_context>
chip_gen: v7x
topology: tpu7x:2x2x1
jax: 0.10.0
libtpu: 0.0.40
codegen_flags: <defaults>
</compile_context>

<pallas_src>
import functools

import jax
import jax.numpy as jnp
from jax.experimental import pallas as pl
from jax.experimental.pallas import tpu as pltpu

LANES = 128


def _round_up(x: int, m: int) -> int:
    return ((x + m - 1) // m) * m


def _cdiv(a: int, b: int) -> int:
    return -(-a // b)


def _h_swish_kernel(x_ref, o_ref, *, compute_dtype):
    # Weak-typed python scalars keep the arithmetic in `compute_dtype`.
    x = x_ref[...].astype(compute_dtype)
    hs = jnp.clip(x + 3.0, 0.0, 6.0) / 6.0          # h_sigmoid = relu6(x+3)/6
    o_ref[...] = (x * hs).astype(o_ref.dtype)


def _h_swish_jnp(x, compute_dtype):
    # Used only for the <=127-element unaligned tail.
    xf = x.astype(compute_dtype)
    return (xf * (jnp.clip(xf + 3.0, 0.0, 6.0) / 6.0)).astype(x.dtype)


def _tpu_caps():
    """(vmem_capacity_bytes, tensorcores_per_chip, is_v5e) with safe fallbacks."""
    vmem_bytes = 128 * 1024 * 1024
    num_cores = 1
    is_v5e = False
    try:
        info = pltpu.get_tpu_info()
        vmem_bytes = int(getattr(info, "vmem_capacity_bytes", vmem_bytes))
        for name in ("num_cores", "core_count", "tensorcore_count", "num_tensorcores"):
            val = getattr(info, name, None)
            if isinstance(val, int) and val > 0:
                num_cores = val
                break
    except Exception:
        pass
    # v7x heuristic: 64 MiB VMEM per TensorCore, two TensorCores per chip.
    if vmem_bytes <= 64 * 1024 * 1024:
        num_cores = max(num_cores, 2)
    try:
        kind = jax.devices()[0].device_kind.lower()
        is_v5e = ("v5 lite" in kind) or ("v5e" in kind) or ("v5lite" in kind)
    except Exception:
        pass
    return vmem_bytes, num_cores, is_v5e


def _run_pallas(x2d, tile_rows, compute_dtype, vmem_limit_bytes):
    rows, lanes = x2d.shape
    itemsize = jnp.dtype(x2d.dtype).itemsize
    grid = (_cdiv(rows, tile_rows),)   # partial last block is masked by Pallas
    kernel = functools.partial(_h_swish_kernel, compute_dtype=compute_dtype)
    return pl.pallas_call(
        kernel,
        out_shape=jax.ShapeDtypeStruct((rows, lanes), x2d.dtype),
        grid_spec=pltpu.PrefetchScalarGridSpec(
            num_scalar_prefetch=0,
            grid=grid,
            in_specs=[pl.BlockSpec((tile_rows, lanes), lambda i: (i, 0))],
            out_specs=pl.BlockSpec((tile_rows, lanes), lambda i: (i, 0)),
        ),
        compiler_params=pltpu.CompilerParams(
            dimension_semantics=("parallel",),
            vmem_limit_bytes=vmem_limit_bytes,
        ),
        cost_estimate=pl.CostEstimate(
            flops=5 * rows * lanes,
            transcendentals=0,
            bytes_accessed=2 * rows * lanes * itemsize,
        ),
    )(x2d)


def h_swish(x: jax.Array) -> jax.Array:
    """Elementwise h_swish: x * relu6(x + 3) / 6. Accepts any shape/dtype."""
    orig_shape = x.shape
    orig_dtype = x.dtype
    total = x.size
    if total == 0:
        return x

    vmem_bytes, num_cores, is_v5e = _tpu_caps()
    itemsize = jnp.dtype(orig_dtype).itemsize

    # bf16-native compute on bf16-VALU chips (v6e/v7x); f32 otherwise
    # (v5e has no bf16 VALU, and f32 inputs match PyTorch numerics).
    if orig_dtype == jnp.bfloat16 and not is_v5e:
        compute_dtype = jnp.bfloat16
    else:
        compute_dtype = jnp.float32

    is_v7x_like = vmem_bytes <= 64 * 1024 * 1024
    target_block_bytes = (8 if is_v7x_like else 4) * 1024 * 1024
    vmem_limit_bytes = 48 * 1024 * 1024   # < 64 MiB/TC physical on v7x

    x_flat = x.reshape(-1)
    rows = total // LANES
    tail_len = total - rows * LANES

    if rows == 0:
        # Tiny input (<128 elements): one (1, 128) block; the <=512 B pad/slice
        # is negligible at this size.
        xp = jnp.pad(x_flat, (0, LANES - total)).reshape(1, LANES)
        out = _run_pallas(xp, 1, compute_dtype, vmem_limit_bytes)
        return out.reshape(-1)[:total].reshape(orig_shape)

    # Kernel streams the 128-aligned prefix; the tail never forces a
    # full-array pad or a trailing full-array slice.
    if tail_len:
        body = x_flat[: rows * LANES].reshape(rows, LANES)
    else:
        body = x_flat.reshape(rows, LANES)

    tile_rows = max(8, (target_block_bytes // (LANES * itemsize)) // 8 * 8)
    tile_rows = min(tile_rows, _round_up(rows, 8))

    # Balanced grid for multi-TensorCore chips (v7x): block count a multiple of
    # the core count with near-equal blocks, but only when there is enough
    # work.  Single-core chips never pay for an extra grid step.
    if num_cores > 1 and rows >= 64:
        grid_n = _cdiv(rows, tile_rows)
        if grid_n % num_cores != 0:
            target_grid = _round_up(grid_n, num_cores)
            tile_rows = min(tile_rows,
                            max(8, _round_up(_cdiv(rows, target_grid), 8)))

    out2d = _run_pallas(body, tile_rows, compute_dtype, vmem_limit_bytes)

    if tail_len:
        tail_out = _h_swish_jnp(x_flat[rows * LANES:], compute_dtype)
        out_flat = jnp.concatenate([out2d.reshape(-1), tail_out])
        return out_flat.reshape(orig_shape)
    return out2d.reshape(orig_shape)


def h_swish_ref(x: jax.Array) -> jax.Array:
    xf = x.astype(jnp.float32)
    y = xf * (jnp.clip(xf + 3.0, 0.0, 6.0) / 6.0)
    return y.astype(x.dtype)


if __name__ == "__main__":
    key = jax.random.PRNGKey(0)
    # NCHW input, matching the PyTorch module's conv-style tensors.
    x = jax.random.normal(key, (2, 4, 16, 16), dtype=jnp.float32) * 4.0

    out = jax.block_until_ready(h_swish(x))
    ref = h_swish_ref(x)
    assert out.shape == x.shape and out.dtype == x.dtype
    assert jnp.allclose(out, ref, atol=1e-6, rtol=1e-6), "mismatch vs reference (f32)"

    # Unaligned element count: exercises the aligned-prefix + jnp-tail path.
    x2 = jax.random.normal(jax.random.PRNGKey(1), (3, 5, 7, 9), dtype=jnp.float32) * 4.0
    out2 = jax.block_until_ready(h_swish(x2))
    assert jnp.allclose(out2, h_swish_ref(x2), atol=1e-6, rtol=1e-6), "mismatch (unaligned)"

    # bf16 input: native bf16 compute on v6e/v7x, f32 upcast on v5e.
    x3 = (jax.random.normal(jax.random.PRNGKey(2), (2, 4, 16, 16), dtype=jnp.float32) * 4.0
          ).astype(jnp.bfloat16)
    out3 = jax.block_until_ready(h_swish(x3))
    ref3 = h_swish_ref(x3)
    assert out3.shape == x3.shape and out3.dtype == jnp.bfloat16
    assert jnp.allclose(out3.astype(jnp.float32), ref3.astype(jnp.float32),
                        atol=0.06, rtol=0.06), "mismatch (bf16)"

    print("KERNEL_OK")
</pallas_src>

<mosaic_0001>
module attributes {stable_mosaic.version = 11 : i64} {
  func.func @_h_swish_kernel(%arg0: i32, %arg1: memref<16x128xf32, #tpu.memory_space<vmem>>, %arg2: memref<16x128xf32, #tpu.memory_space<vmem>>) attributes {dimension_semantics = [#tpu.dimension_semantics<parallel>], iteration_bounds = array<i64: 1>, scalar_prefetch = 0 : i64, scratch_operands = 0 : i64, tpu.core_type = #tpu.core_type<tc>, window_params = [{transform_indices = @transform_0, window_bounds = array<i64: 16, 128>}, {transform_indices = @transform_1, window_bounds = array<i64: 16, 128>}]} {
    %c0 = arith.constant 0 : index
    %c0_0 = arith.constant 0 : index
    %0 = vector.load %arg1[%c0, %c0_0] : memref<16x128xf32, #tpu.memory_space<vmem>>, vector<16x128xf32>
    %cst = arith.constant 3.000000e+00 : f32
    %1 = vector.broadcast %cst : f32 to vector<16x128xf32>
    %2 = arith.addf %0, %1 : vector<16x128xf32>
    %cst_1 = arith.constant 0.000000e+00 : f32
    %cst_2 = arith.constant 6.000000e+00 : f32
    %3 = vector.broadcast %cst_1 : f32 to vector<16x128xf32>
    %4 = arith.maximumf %3, %2 : vector<16x128xf32>
    %5 = vector.broadcast %cst_2 : f32 to vector<16x128xf32>
    %6 = arith.minimumf %5, %4 : vector<16x128xf32>
    %cst_3 = arith.constant 6.000000e+00 : f32
    %7 = vector.broadcast %cst_3 : f32 to vector<16x128xf32>
    %8 = arith.divf %6, %7 : vector<16x128xf32>
    %9 = arith.mulf %0, %8 : vector<16x128xf32>
    %c0_4 = arith.constant 0 : index
    %c0_5 = arith.constant 0 : index
    %10 = vector.load %arg2[%c0_4, %c0_5] : memref<16x128xf32, #tpu.memory_space<vmem>>, vector<16x128xf32>
    tpu.vector_store %arg2[%c0_4, %c0_5], %9 {strides = array<i32>} : memref<16x128xf32, #tpu.memory_space<vmem>>, vector<16x128xf32>,
    return
  }
  func.func @transform_0(%arg0: i32) -> (i32, i32) {
    %c0_i32 = arith.constant 0 : i32
    %c0_i32_0 = arith.constant 0 : i32
    return %arg0, %c0_i32 : i32, i32
  }
  func.func @transform_1(%arg0: i32) -> (i32, i32) {
    %c0_i32 = arith.constant 0 : i32
    %c0_i32_0 = arith.constant 0 : i32
    return %arg0, %c0_i32 : i32, i32
  }
}

</mosaic_0001>

<llo_original>
// kernel: tpu_custom_call.1
$region0: #{tpu_custom_call.1}
  #allocation0 [shape = 'u32[]', space=smem, size = 0x4, offset = 0x4, fixed_abs, tag = 'smem constant byte address 0x4 - core index']
  #allocation1 [shape = 'u32[144,128]{1,0:T(1,128)}', space=vmem, size = 0x12000, scoped, tag = 'internal scratch']
  %s0 = inlined_call_operand.hbm [shape: f32[16,128], index: 0, kind: input, shape index: {}]
  %s1 = inlined_call_operand.hbm [shape: f32[16,128], index: 1, kind: output, shape index: {}]
  %s2 = sld [smem:[#allocation0]]
  $region18: #{tpu_custom_call.1} parent=0
    _
  %s4 = ssub.s32 1, %s2
  %s5 = scalar_select 0, %s4, %s2
  $region1: #{tpu_custom_call.1} parent=0
    #allocation2 [shape = 'u8[8192]{0}', space=vmem, size = 0x2000, scoped, tag = 'input window, operand 0, single buffered']
    #allocation3 [shape = 's32[1]{0}', space=sflag, size = 0x4, scoped, tag = 'scoped memory for tpu_custom_call.1']
    #allocation4 [shape = 's32[1]{0}', space=sflag, size = 0x4, scoped, tag = 'scoped memory for tpu_custom_call.1']
    #allocation5 [shape = 'u8[8192]{0}', space=vmem, size = 0x2000, scoped, tag = 'output window, operand 0, single buffered']
    %6 = vsyncpa [#allocation3], 0
    %7 = vsyncpa [#allocation4], 0
    // Predicated region
    $region2: #{tpu_custom_call.1} parent=1 // pred_check
      _
    $region3: #{tpu_custom_call.1} parent=1 // pred_check_branch
      %9 = sbr.rel (0) target = $region5
    $region4: #{tpu_custom_call.1} parent=1 // pred_region
      %s11 = ssub.s32 256, 256
      %12 = vsyncadd [#allocation3], %s11
      %s13 = sshll.u32 [#allocation2], 4
      %s14 = int_to_ptr.vmem [resolvable:$true] %s13
      %19 = dma.hbm_to_vmem [thread:$0]  %s0, 256, %s14, [#allocation3], 128, 128, 8
    $region5: #{tpu_custom_call.1} parent=1 // pred_fallthru
      _
    // Predicated region
    $region6: #{tpu_custom_call.1} parent=1 // pred_check
      _
    $region7: #{tpu_custom_call.1} parent=1 // pred_check_branch
      %21 = sbr.rel (0) target = $region9
    $region8: #{tpu_custom_call.1} parent=1 // pred_region
      %22 = dma.done [#allocation3], 256
    $region9: #{tpu_custom_call.1} parent=1 // pred_fallthru
      _
    %v23 = vld [vmem:[#allocation2] sm:$0xff]
    %v24 = vld [vmem:[#allocation2 + $0x8] sm:$0xff]
    %v25 = vadd.f32 %v23, 3.0
    %v26 = vadd.f32 %v24, 3.0
    %v27 = vmax.f32 %v25, 0.0
    %v28 = vmax.f32 %v26, 0.0
    %v29 = vmin.f32 %v27, 6.0
    %v30 = vmin.f32 %v28, 6.0
    %v31 = vrcp.pop 6.0
    %v32 = vmul.f32 %v29, %v31
    %v33 = vmul.f32 %v30, %v31
    %v34 = vmul.f32 %v23, %v32
    %v35 = vmul.f32 %v24, %v33
    %36 = vst [vmem:[#allocation5] sm:$0xff] %v34
    %37 = vst [vmem:[#allocation5 + $0x8] sm:$0xff] %v35
    // Predicated region
    $region10: #{tpu_custom_call.1} parent=1 // pred_check
      _
    $region11: #{tpu_custom_call.1} parent=1 // pred_check_branch
      %39 = sbr.rel (0) target = $region13
    $region12: #{tpu_custom_call.1} parent=1 // pred_region
      %s41 = ssub.s32 256, 256
      %42 = vsyncadd [#allocation4], %s41
      %s43 = sshll.u32 [#allocation5], 4
      %s44 = int_to_ptr.vmem [resolvable:$true] %s43
      %49 = dma.vmem_to_hbm [thread:$0]  %s44, 256, %s1, [#allocation4], 128, 128, 8
    $region13: #{tpu_custom_call.1} parent=1 // pred_fallthru
      _
    // Predicated region
    $region14: #{tpu_custom_call.1} parent=1 // pred_check
      _
    $region15: #{tpu_custom_call.1} parent=1 // pred_check_branch
      %51 = sbr.rel (0) target = $region17
    $region16: #{tpu_custom_call.1} parent=1 // pred_region
      %52 = dma.done [#allocation4], 256
    $region17: #{tpu_custom_call.1} parent=1 // pred_fallthru
      _
    %53 = vsyncpa [#allocation3], 1
    %54 = vsyncpa [#allocation4], 1

</llo_original>
